<compile_context>
chip_gen: v7x
topology: tpu7x:2x2x1
jax: 0.10.0
libtpu: 0.0.40
codegen_flags: <defaults>
</compile_context>

<pallas_src>
import functools

import jax
import jax.numpy as jnp
from jax.experimental import pallas as pl
from jax.experimental.pallas import tpu as pltpu


# -----------------------------------------------------------------------------
# Pallas kernel:  acc += relu(x @ W1[:,k] + b1[k]) @ W2[k,:]   (k = pf tile)
#                 o    = acc + b2                              (at last k)
# -----------------------------------------------------------------------------
def _ffn_kernel(x_ref, w1_ref, b1_ref, w2_ref, b2_ref, o_ref, acc_ref):
    # x_ref : (tm, hid)   resident across the k axis, streamed over rows
    # w1_ref: (hid, tk)   streamed over k
    # b1_ref: (1, tk)     f32, streamed over k
    # w2_ref: (tk, hid)   streamed over k
    # b2_ref: (1, hid)    f32, resident (single-buffered)
    # o_ref : (tm, hid)   written once per row tile (at k == last)
    # acc_ref: (tm, hid)  f32 VMEM scratch accumulator
    k = pl.program_id(1)

    @pl.when(k == 0)
    def _init():
        acc_ref[...] = jnp.zeros_like(acc_ref)

    # First matmul: f32 accumulation on the MXU; bias + ReLU stay in f32
    # (works on v5e which has no bf16 VPU path).
    h = jnp.dot(x_ref[...], w1_ref[...], preferred_element_type=jnp.float32)
    h = jnp.maximum(h + b1_ref[...], 0.0)
    # TODO(synk): nn.Dropout treated as identity (eval-mode semantics).

    # Second matmul: cast only the MXU operand to the compute dtype.
    acc_ref[...] += jnp.dot(h.astype(w2_ref.dtype), w2_ref[...],
                            preferred_element_type=jnp.float32)

    @pl.when(k == pl.num_programs(1) - 1)
    def _finalize():
        o_ref[...] = (acc_ref[...] + b2_ref[...]).astype(o_ref.dtype)


# -----------------------------------------------------------------------------
# Wrapper
# -----------------------------------------------------------------------------
def _round_up(n, m):
    return ((n + m - 1) // m) * m


def positionwise_feedforward(x, w1, b1, w2, b2, *, tile_m=512, tile_k=512,
                             compute_dtype=None):
    """Fused FFN forward.

    x : (..., hid_dim)
    w1: (hid_dim, pf_dim)   == torch fc_1.weight.T
    b1: (pf_dim,)
    w2: (pf_dim, hid_dim)   == torch fc_2.weight.T
    b2: (hid_dim,)
    compute_dtype: None (keep x.dtype, e.g. f32) or jnp.bfloat16 — valid on
      v5e/v6e/v7x; MXU operands AND the output use this dtype, while the
      accumulator / bias adds / ReLU stay f32 inside the kernel.
    """
    orig_shape = x.shape
    hid, pf = w1.shape
    assert w2.shape == (pf, hid)
    assert x.shape[-1] == hid

    out_dtype = compute_dtype if compute_dtype is not None else x.dtype

    x2 = x.reshape(-1, hid)
    M = x2.shape[0]

    if compute_dtype is not None:
        x2 = x2.astype(compute_dtype)
        w1 = w1.astype(compute_dtype)
        w2 = w2.astype(compute_dtype)
    # Biases stay f32: added to the f32 accumulators in-kernel.
    b1r = b1.astype(jnp.float32).reshape(1, pf)
    b2r = b2.astype(jnp.float32).reshape(1, hid)

    in_bytes = jnp.dtype(x2.dtype).itemsize
    w_bytes = jnp.dtype(w1.dtype).itemsize
    out_bytes = jnp.dtype(out_dtype).itemsize

    # Packed-sublane multiple for the compute dtype (8 f32 / 16 bf16 / 32 i8).
    sub = {4: 8, 2: 16, 1: 32}.get(in_bytes, 8)

    # Row tile: as large as tile_m, but small enough that the row grid has
    # >= 2 steps when M allows it (lets v7x's two TensorCores share work).
    tm = min(tile_m, max(sub, _round_up(pl.cdiv(M, 2), sub)))
    tm = _round_up(tm, sub)
    grid_m = pl.cdiv(M, tm)          # partial final block masked by Pallas

    # pf (reduction) tile: must divide pf and be lane-dense (multiple of 128).
    if tile_k is None or tile_k >= pf or pf % tile_k != 0 or tile_k % 128 != 0:
        tk = pf
    else:
        tk = tile_k
    grid_k = pf // tk

    # Single-buffer operands whose block never changes across the grid.
    resident = pl.Buffered(1)
    w_mode = resident if grid_k == 1 else None   # W1/b1/W2 stream when tiled

    # Raise the scoped VMEM limit only when the tile footprint needs it.
    vmem_est = (2 * tm * hid * in_bytes            # x (double-buffered)
                + 2 * (hid * tk + tk * hid) * w_bytes
                + 2 * (tk + hid) * 4               # biases
                + 2 * tm * hid * out_bytes         # output
                + tm * hid * 4                     # f32 accumulator scratch
                + tm * tk * 4)                     # f32 intermediate h
    vmem_limit = None
    if vmem_est > (12 << 20):
        vmem_limit = min(int(vmem_est * 1.5) + (4 << 20), 64 << 20)

    cost = pl.CostEstimate(
        flops=4 * M * hid * pf,      # two matmuls
        transcendentals=0,
        bytes_accessed=(M * hid * (in_bytes + out_bytes)
                        + 2 * hid * pf * w_bytes + (pf + hid) * 4))

    out = pl.pallas_call(
        _ffn_kernel,
        out_shape=jax.ShapeDtypeStruct((M, hid), out_dtype),
        grid_spec=pltpu.PrefetchScalarGridSpec(
            num_scalar_prefetch=0,
            grid=(grid_m, grid_k),
            in_specs=[
                pl.BlockSpec((tm, hid), lambda i, k: (i, 0)),   # x rows
                pl.BlockSpec((hid, tk), lambda i, k: (0, k),
                             pipeline_mode=w_mode),             # W1 tile
                pl.BlockSpec((1, tk), lambda i, k: (0, k),
                             pipeline_mode=w_mode),             # b1 tile
                pl.BlockSpec((tk, hid), lambda i, k: (k, 0),
                             pipeline_mode=w_mode),             # W2 tile
                pl.BlockSpec((1, hid), lambda i, k: (0, 0),
                             pipeline_mode=resident),           # b2 (resident)
            ],
            out_specs=pl.BlockSpec((tm, hid), lambda i, k: (i, 0)),
            scratch_shapes=[pltpu.VMEM((tm, hid), jnp.float32)],
        ),
        compiler_params=pltpu.CompilerParams(
            dimension_semantics=("parallel", "arbitrary"),
            vmem_limit_bytes=vmem_limit),
        cost_estimate=cost,
    )(x2, w1, b1r, w2, b2r)

    return out.reshape(orig_shape[:-1] + (hid,))


# -----------------------------------------------------------------------------
# Pure-JAX reference for correctness checking
# -----------------------------------------------------------------------------
def ref_ffn(x, w1, b1, w2, b2):
    h = jnp.maximum(jnp.einsum("...i,ij->...j", x, w1) + b1, 0.0)
    return jnp.einsum("...i,ij->...j", h, w2) + b2


# -----------------------------------------------------------------------------
if __name__ == "__main__":
    # PositionwiseFeedforwardLayer(hid_dim=128, pf_dim=256, dropout=0.1)
    # input x: (batch=2, seq=16, hid_dim=128) -- lane-dense channel dims.
    B, S, HID, PF = 2, 16, 128, 256

    key = jax.random.PRNGKey(0)
    kx, k1, k2, k3, k4 = jax.random.split(key, 5)
    x = jax.random.normal(kx, (B, S, HID), dtype=jnp.float32)
    # fc_1 / fc_2 parameters (stored pre-transposed: (in, out) == weight.T)
    w1 = jax.random.normal(k1, (HID, PF), dtype=jnp.float32) * 0.02
    b1 = jax.random.normal(k2, (PF,), dtype=jnp.float32) * 0.02
    w2 = jax.random.normal(k3, (PF, HID), dtype=jnp.float32) * 0.02
    b2 = jax.random.normal(k4, (HID,), dtype=jnp.float32) * 0.02

    ref = jax.block_until_ready(ref_ffn(x, w1, b1, w2, b2))

    # f32 path, pf fully resident (single k step), row grid split into 2 tiles.
    fwd = jax.jit(functools.partial(positionwise_feedforward, tile_m=512))
    out = jax.block_until_ready(fwd(x, w1, b1, w2, b2))
    assert out.shape == (B, S, HID), out.shape
    assert jnp.allclose(out, ref, atol=1e-5, rtol=1e-5), float(
        jnp.max(jnp.abs(out - ref)))

    # f32 path exercising the pf reduction axis (tile_k=128 -> 2 k steps).
    fwd_k = jax.jit(functools.partial(positionwise_feedforward, tile_k=128))
    out_k = jax.block_until_ready(fwd_k(x, w1, b1, w2, b2))
    assert jnp.allclose(out_k, ref, atol=1e-5, rtol=1e-5), float(
        jnp.max(jnp.abs(out_k - ref)))

    # bf16 compute/output path (valid on v5e/v6e/v7x; f32 accumulation inside).
    fwd_bf16 = jax.jit(functools.partial(
        positionwise_feedforward, compute_dtype=jnp.bfloat16, tile_k=128))
    out_bf16 = jax.block_until_ready(fwd_bf16(x, w1, b1, w2, b2))
    assert out_bf16.shape == (B, S, HID)
    assert out_bf16.dtype == jnp.bfloat16
    assert jnp.allclose(out_bf16.astype(jnp.float32), ref,
                        atol=5e-2, rtol=5e-2), float(
        jnp.max(jnp.abs(out_bf16.astype(jnp.float32) - ref)))

    # Ragged row count (M=15 not a multiple of the row tile) -> exercises the
    # masked partial final block (no wrapper pad/slice round-trip).
    x_rag = jax.random.normal(kx, (3, 5, HID), dtype=jnp.float32)
    ref_rag = ref_ffn(x_rag, w1, b1, w2, b2)
    out_rag = jax.block_until_ready(
        jax.jit(functools.partial(positionwise_feedforward, tile_m=8))(
            x_rag, w1, b1, w2, b2))
    assert out_rag.shape == (3, 5, HID)
    assert jnp.allclose(out_rag, ref_rag, atol=1e-5, rtol=1e-5), float(
        jnp.max(jnp.abs(out_rag - ref_rag)))

    print("KERNEL_OK")
</pallas_src>

<mosaic_0001>
module attributes {stable_mosaic.version = 11 : i64} {
  func.func @_ffn_kernel(%arg0: i32, %arg1: i32, %arg2: memref<16x128xf32, #tpu.memory_space<vmem>>, %arg3: memref<128x256xf32, #tpu.memory_space<vmem>>, %arg4: memref<1x256xf32, #tpu.memory_space<vmem>>, %arg5: memref<256x128xf32, #tpu.memory_space<vmem>>, %arg6: memref<1x128xf32, #tpu.memory_space<vmem>>, %arg7: memref<16x128xf32, #tpu.memory_space<vmem>>, %arg8: memref<16x128xf32, #tpu.memory_space<vmem>>) attributes {dimension_semantics = [#tpu.dimension_semantics<parallel>, #tpu.dimension_semantics<arbitrary>], iteration_bounds = array<i64: 2, 1>, scalar_prefetch = 0 : i64, scratch_operands = 1 : i64, tpu.core_type = #tpu.core_type<tc>, window_params = [{transform_indices = @transform_0, window_bounds = array<i64: 16, 128>}, {pipeline_mode = #tpu.pipeline_mode<synchronous>, transform_indices = @transform_1, window_bounds = array<i64: 128, 256>}, {pipeline_mode = #tpu.pipeline_mode<synchronous>, transform_indices = @transform_2, window_bounds = array<i64: 1, 256>}, {pipeline_mode = #tpu.pipeline_mode<synchronous>, transform_indices = @transform_3, window_bounds = array<i64: 256, 128>}, {pipeline_mode = #tpu.pipeline_mode<synchronous>, transform_indices = @transform_4, window_bounds = array<i64: 1, 128>}, {transform_indices = @transform_5, window_bounds = array<i64: 16, 128>}]} {
    %c0_i32 = arith.constant 0 : i32
    %0 = arith.cmpi eq, %arg1, %c0_i32 : i32
    %1 = arith.extui %0 : i1 to i32
    %c0_i32_0 = arith.constant 0 : i32
    %2 = arith.cmpi ne, %1, %c0_i32_0 : i32
    scf.if %2 {
      %cst_16 = arith.constant 0.000000e+00 : f32
      %19 = vector.broadcast %cst_16 : f32 to vector<16x128xf32>
      %c0_17 = arith.constant 0 : index
      %c0_18 = arith.constant 0 : index
      %20 = vector.load %arg8[%c0_17, %c0_18] : memref<16x128xf32, #tpu.memory_space<vmem>>, vector<16x128xf32>
      tpu.vector_store %arg8[%c0_17, %c0_18], %19 {strides = array<i32>} : memref<16x128xf32, #tpu.memory_space<vmem>>, vector<16x128xf32>,
    } else {
    }
    %c0 = arith.constant 0 : index
    %c0_1 = arith.constant 0 : index
    %3 = vector.load %arg2[%c0, %c0_1] : memref<16x128xf32, #tpu.memory_space<vmem>>, vector<16x128xf32>
    %c0_2 = arith.constant 0 : index
    %c0_3 = arith.constant 0 : index
    %4 = vector.load %arg3[%c0_2, %c0_3] : memref<128x256xf32, #tpu.memory_space<vmem>>, vector<128x256xf32>
    %cst = arith.constant dense<0.000000e+00> : vector<16x256xf32>
    %5 = tpu.matmul %3, %4, %cst {dimension_numbers = #tpu.dot_dimension_numbers<[1], [0], [0], [1], [0, 0, 1, 1], [], []>} : vector<16x128xf32>, vector<128x256xf32>, vector<16x256xf32> -> vector<16x256xf32>
    %c0_4 = arith.constant 0 : index
    %c0_5 = arith.constant 0 : index
    %6 = vector.load %arg4[%c0_4, %c0_5] : memref<1x256xf32, #tpu.memory_space<vmem>>, vector<1x256xf32>
    %7 = vector.broadcast %6 : vector<1x256xf32> to vector<16x256xf32>
    %8 = arith.addf %5, %7 : vector<16x256xf32>
    %cst_6 = arith.constant 0.000000e+00 : f32
    %9 = vector.broadcast %cst_6 : f32 to vector<16x256xf32>
    %10 = arith.maximumf %8, %9 : vector<16x256xf32>
    %c0_7 = arith.constant 0 : index
    %c0_8 = arith.constant 0 : index
    %11 = vector.load %arg8[%c0_7, %c0_8] : memref<16x128xf32, #tpu.memory_space<vmem>>, vector<16x128xf32>
    %c0_9 = arith.constant 0 : index
    %c0_10 = arith.constant 0 : index
    %12 = vector.load %arg5[%c0_9, %c0_10] : memref<256x128xf32, #tpu.memory_space<vmem>>, vector<256x128xf32>
    %cst_11 = arith.constant dense<0.000000e+00> : vector<16x128xf32>
    %13 = tpu.matmul %10, %12, %cst_11 {dimension_numbers = #tpu.dot_dimension_numbers<[1], [0], [0], [1], [0, 0, 1, 1], [], []>} : vector<16x256xf32>, vector<256x128xf32>, vector<16x128xf32> -> vector<16x128xf32>
    %14 = arith.addf %11, %13 : vector<16x128xf32>
    %c0_12 = arith.constant 0 : index
    %c0_13 = arith.constant 0 : index
    %15 = vector.load %arg8[%c0_12, %c0_13] : memref<16x128xf32, #tpu.memory_space<vmem>>, vector<16x128xf32>
    tpu.vector_store %arg8[%c0_12, %c0_13], %14 {strides = array<i32>} : memref<16x128xf32, #tpu.memory_space<vmem>>, vector<16x128xf32>,
    %c0_i32_14 = arith.constant 0 : i32
    %16 = arith.cmpi eq, %arg1, %c0_i32_14 : i32
    %17 = arith.extui %16 : i1 to i32
    %c0_i32_15 = arith.constant 0 : i32
    %18 = arith.cmpi ne, %17, %c0_i32_15 : i32
    scf.if %18 {
      %c0_16 = arith.constant 0 : index
      %c0_17 = arith.constant 0 : index
      %19 = vector.load %arg8[%c0_16, %c0_17] : memref<16x128xf32, #tpu.memory_space<vmem>>, vector<16x128xf32>
      %c0_18 = arith.constant 0 : index
      %c0_19 = arith.constant 0 : index
      %20 = vector.load %arg6[%c0_18, %c0_19] : memref<1x128xf32, #tpu.memory_space<vmem>>, vector<1x128xf32>
      %21 = vector.broadcast %20 : vector<1x128xf32> to vector<16x128xf32>
      %22 = arith.addf %19, %21 : vector<16x128xf32>
      %c0_20 = arith.constant 0 : index
      %c0_21 = arith.constant 0 : index
      %23 = vector.load %arg7[%c0_20, %c0_21] : memref<16x128xf32, #tpu.memory_space<vmem>>, vector<16x128xf32>
      tpu.vector_store %arg7[%c0_20, %c0_21], %22 {strides = array<i32>} : memref<16x128xf32, #tpu.memory_space<vmem>>, vector<16x128xf32>,
    } else {
    }
    return
  }
  func.func @transform_0(%arg0: i32, %arg1: i32) -> (i32, i32) {
    %c0_i32 = arith.constant 0 : i32
    %c0_i32_0 = arith.constant 0 : i32
    return %arg0, %c0_i32 : i32, i32
  }
  func.func @transform_1(%arg0: i32, %arg1: i32) -> (i32, i32) {
    %c0_i32 = arith.constant 0 : i32
    %c0_i32_0 = arith.constant 0 : i32
    return %c0_i32, %arg1 : i32, i32
  }
  func.func @transform_2(%arg0: i32, %arg1: i32) -> (i32, i32) {
    %c0_i32 = arith.constant 0 : i32
    %c0_i32_0 = arith.constant 0 : i32
    return %c0_i32, %arg1 : i32, i32
  }
  func.func @transform_3(%arg0: i32, %arg1: i32) -> (i32, i32) {
    %c0_i32 = arith.constant 0 : i32
    %c0_i32_0 = arith.constant 0 : i32
    return %arg1, %c0_i32 : i32, i32
  }
  func.func @transform_4(%arg0: i32, %arg1: i32) -> (i32, i32) {
    %c0_i32 = arith.constant 0 : i32
    %c0_i32_0 = arith.constant 0 : i32
    %c0_i32_1 = arith.constant 0 : i32
    return %c0_i32, %c0_i32_0 : i32, i32
  }
  func.func @transform_5(%arg0: i32, %arg1: i32) -> (i32, i32) {
    %c0_i32 = arith.constant 0 : i32
    %c0_i32_0 = arith.constant 0 : i32
    return %arg0, %c0_i32 : i32, i32
  }
}

</mosaic_0001>

<llo_original>
// kernel: positionwise_feedforward.1
$region0: #{positionwise_feedforward.1}
  #allocation0 [shape = 'u32[]', space=smem, size = 0x4, offset = 0x4, fixed_abs, tag = 'smem constant byte address 0x4 - core index']
  #allocation1 [shape = 'u32[144,128]{1,0:T(1,128)}', space=vmem, size = 0x12000, scoped, tag = 'internal scratch']
  #allocation2 [shape = 'f32[16,128]{1,0:T(8,128)}', space=vmem, size = 0x2000, scoped, tag = 'scratch operand']
  %s0 = inlined_call_operand.hbm [shape: f32[32,128], index: 0, kind: input, shape index: {}]
  %s1 = inlined_call_operand.hbm [shape: f32[128,256], index: 1, kind: input, shape index: {}]
  %s2 = inlined_call_operand.vmem [shape: f32[1,256], index: 2, kind: input, shape index: {}]
  %s3 = inlined_call_operand.hbm [shape: f32[256,128], index: 3, kind: input, shape index: {}]
  %s4 = inlined_call_operand.vmem [shape: f32[1,128], index: 4, kind: input, shape index: {}]
  %s5 = inlined_call_operand.hbm [shape: f32[32,128], index: 5, kind: output, shape index: {}]
  %s6 = sld [smem:[#allocation0]]
  $region73: #{positionwise_feedforward.1} parent=0
    _
  %s8 = ssub.s32 1, %s6
  %s9 = scalar_select 0, %s8, %s6
  $region1: #{positionwise_feedforward.1} parent=0
    #allocation3 [shape = 'u8[16384]{0}', space=vmem, size = 0x4000, scoped, tag = 'input window, operand 0']
    #allocation4 [shape = 's32[2]{0}', space=sflag, size = 0x8, scoped, tag = 'scoped memory for positionwise_feedforward.1']
    #allocation5 [shape = 's32[2]{0}', space=sflag, size = 0x8, scoped, tag = 'scoped memory for positionwise_feedforward.1']
    #allocation6 [shape = 'u8[131072]{0}', space=vmem, size = 0x20000, scoped, tag = 'input window, operand 1, single buffered']
    #allocation7 [shape = 's32[1]{0}', space=sflag, size = 0x4, scoped, tag = 'scoped memory for positionwise_feedforward.1']
    #allocation8 [shape = 'u8[131072]{0}', space=vmem, size = 0x20000, scoped, tag = 'input window, operand 3, single buffered']
    #allocation9 [shape = 'u8[16384]{0}', space=vmem, size = 0x4000, scoped, tag = 'output window, operand 0']
    %10 = vsyncpa [#allocation4], 0
    %s11 = scalar_lea.sflag [#allocation4], 1
    %12 = vsyncpa %s11, 0
    %13 = vsyncpa [#allocation7], 0
    %14 = vsyncpa [#allocation5], 0
    %s15 = scalar_lea.sflag [#allocation5], 1
    %16 = vsyncpa %s15, 0
    loop: start=0, step=1, limit=4
    $region2: #{positionwise_feedforward.1} parent=1 // loop_pre_header
      _
    $region3: #{positionwise_feedforward.1} parent=1 // loop_header
      %s18 = sphi 0, %s22
      %p19 = scmp.ge.s32.totalorder %s18, 4
      %s25 = sphi 0, %s37
      %s26 = sphi 0, %s33
      %s27 = sphi 0, %s25
      %s28 = sphi 0, %s26
      %s29 = sphi 0, %s27
      %s30 = sphi 0, %s28
      %s40 = sphi 0, %s42
      %s43 = sphi 0, %s40
      %s44 = sphi 0, %s43
      %s60 = sphi 0, %s44
      %s66 = sphi 0, %s68
      %s69 = sphi 0, %s66
      %s70 = sphi 0, %s69
      %s86 = sphi 0, %s70
      %s92 = sphi 0, %s94
      %s95 = sphi 0, %s92
      %s96 = sphi 0, %s95
      %s112 = sphi 0, %s96
      %s118 = sphi 0, %s120
      %s121 = sphi 0, %s118
      %s122 = sphi 0, %s121
      %s138 = sphi 0, %s122
      %s142 = sphi 0, %s142
      %s144 = sphi 0, %s142
      %s145 = sphi 0, %s144
      %s159 = sphi 0, %s145
      %s165 = sphi 0, %s167
      %s168 = sphi 0, %s165
      %s169 = sphi 0, %s168
      %s185 = sphi 0, %s169
    $region4: #{positionwise_feedforward.1} parent=1 // loop_header_branch
      %21 = sbr.rel (%p19) target = $region8
    $region5: #{positionwise_feedforward.1} parent=1 // loop_body
      %s23 = ssub.s32 %s18, 1
      %s24 = ssub.s32 %s18, 2
      %s31 = sadd.s32 1, %s26
      %p32 = scmp.ge.s32.totalorder %s31, 1
      %s33 = scalar_select %p32, 0, %s31
      %s34 = sadd.s32 1, %s25
      %s35 = scalar_select %p32, %s34, %s25
      %p36 = scmp.ge.s32.totalorder %s35, 2
      %s37 = scalar_select %p36, 0, %s35
      %s38 = ssub.s32 %s25, %s37
      %p39 = scmp.eq.s32.totalorder %s38, 0
      %s41 = sadd.s32 %s40, 1
      %s42 = scalar_select %p39, %s40, %s41
      %p45 = pneg %p39
      %p46 = scmp.eq.s32.totalorder %s18, 1
      %p47 = por %p45, %p46
      %p48 = scmp.ne.s32.totalorder %s40, %s43
      %p49 = scmp.eq.s32.totalorder %s18, 0
      %p50 = por %p48, %p49
      %p51 = scmp.ne.s32.totalorder %s40, %s43
      %p52 = scmp.eq.s32.totalorder %s23, 1
      %p53 = por %p51, %p52
      %p54 = scmp.ne.s32.totalorder %s43, %s44
      %p55 = scmp.eq.s32.totalorder %s23, 0
      %p56 = por %p54, %p55
      %p57 = scmp.ne.s32.totalorder %s43, %s44
      %p58 = scmp.eq.s32.totalorder %s24, 1
      %p59 = por %p57, %p58
      %p61 = scmp.ne.s32.totalorder %s44, %s60
      %p62 = scmp.eq.s32.totalorder %s24, 0
      %p63 = por %p61, %p62
      %s64 = ssub.s32 %s26, %s33
      %p65 = scmp.eq.s32.totalorder %s64, 0
      %s67 = sadd.s32 %s66, 1
      %s68 = scalar_select %p65, %s66, %s67
      %p71 = pneg %p65
      %p72 = scmp.eq.s32.totalorder %s18, 1
      %p73 = por %p71, %p72
      %p74 = scmp.ne.s32.totalorder %s66, %s69
      %p75 = scmp.eq.s32.totalorder %s18, 0
      %p76 = por %p74, %p75
      %p77 = scmp.ne.s32.totalorder %s66, %s69
      %p78 = scmp.eq.s32.totalorder %s23, 1
      %p79 = por %p77, %p78
      %p80 = scmp.ne.s32.totalorder %s69, %s70
      %p81 = scmp.eq.s32.totalorder %s23, 0
      %p82 = por %p80, %p81
      %p83 = scmp.ne.s32.totalorder %s69, %s70
      %p84 = scmp.eq.s32.totalorder %s24, 1
      %p85 = por %p83, %p84
      %p87 = scmp.ne.s32.totalorder %s70, %s86
      %p88 = scmp.eq.s32.totalorder %s24, 0
      %p89 = por %p87, %p88
      %s90 = ssub.s32 %s26, %s33
      %p91 = scmp.eq.s32.totalorder %s90, 0
      %s93 = sadd.s32 %s92, 1
      %s94 = scalar_select %p91, %s92, %s93
      %p97 = pneg %p91
      %p98 = scmp.eq.s32.totalorder %s18, 1
      %p99 = por %p97, %p98
      %p100 = scmp.ne.s32.totalorder %s92, %s95
      %p101 = scmp.eq.s32.totalorder %s18, 0
      %p102 = por %p100, %p101
      %p103 = scmp.ne.s32.totalorder %s92, %s95
      %p104 = scmp.eq.s32.totalorder %s23, 1
      %p105 = por %p103, %p104
      %p106 = scmp.ne.s32.totalorder %s95, %s96
      %p107 = scmp.eq.s32.totalorder %s23, 0
      %p108 = por %p106, %p107
      %p109 = scmp.ne.s32.totalorder %s95, %s96
      %p110 = scmp.eq.s32.totalorder %s24, 1
      %p111 = por %p109, %p110
      %p113 = scmp.ne.s32.totalorder %s96, %s112
      %p114 = scmp.eq.s32.totalorder %s24, 0
      %p115 = por %p113, %p114
      %s116 = ssub.s32 %s26, %s33
      %p117 = scmp.eq.s32.totalorder %s116, 0
      %s119 = sadd.s32 %s118, 1
      %s120 = scalar_select %p117, %s118, %s119
      %p123 = pneg %p117
      %p124 = scmp.eq.s32.totalorder %s18, 1
      %p125 = por %p123, %p124
      %p126 = scmp.ne.s32.totalorder %s118, %s121
      %p127 = scmp.eq.s32.totalorder %s18, 0
      %p128 = por %p126, %p127
      %p129 = scmp.ne.s32.totalorder %s118, %s121
      %p130 = scmp.eq.s32.totalorder %s23, 1
      %p131 = por %p129, %p130
      %p132 = scmp.ne.s32.totalorder %s121, %s122
      %p133 = scmp.eq.s32.totalorder %s23, 0
      %p134 = por %p132, %p133
      %p135 = scmp.ne.s32.totalorder %s121, %s122
      %p136 = scmp.eq.s32.totalorder %s24, 1
      %p137 = por %p135, %p136
      %p139 = scmp.ne.s32.totalorder %s122, %s138
      %p140 = scmp.eq.s32.totalorder %s24, 0
      %p141 = por %p139, %p140
      %s143 = sadd.s32 %s142, 1
      %p146 = scmp.eq.s32.totalorder %s18, 1
      %p147 = scmp.ne.s32.totalorder %s142, %s144
      %p148 = scmp.eq.s32.totalorder %s18, 0
      %p149 = por %p147, %p148
      %p150 = scmp.ne.s32.totalorder %s142, %s144
      %p151 = scmp.eq.s32.totalorder %s23, 1
      %p152 = por %p150, %p151
      %p153 = scmp.ne.s32.totalorder %s144, %s145
      %p154 = scmp.eq.s32.totalorder %s23, 0
      %p155 = por %p153, %p154
      %p156 = scmp.ne.s32.totalorder %s144, %s145
      %p157 = scmp.eq.s32.totalorder %s24, 1
      %p158 = por %p156, %p157
      %p160 = scmp.ne.s32.totalorder %s145, %s159
      %p161 = scmp.eq.s32.totalorder %s24, 0
      %p162 = por %p160, %p161
      %s163 = ssub.s32 %s25, %s37
      %p164 = scmp.eq.s32.totalorder %s163, 0
      %s166 = sadd.s32 %s165, 1
      %s167 = scalar_select %p164, %s165, %s166
      %p170 = pneg %p164
      %p171 = scmp.eq.s32.totalorder %s18, 1
      %p172 = por %p170, %p171
      %p173 = scmp.ne.s32.totalorder %s165, %s168
      %p174 = scmp.eq.s32.totalorder %s18, 0
      %p175 = por %p173, %p174
      %p176 = scmp.ne.s32.totalorder %s165, %s168
      %p177 = scmp.eq.s32.totalorder %s23, 1
      %p178 = por %p176, %p177
      %p179 = scmp.ne.s32.totalorder %s168, %s169
      %p180 = scmp.eq.s32.totalorder %s23, 0
      %p181 = por %p179, %p180
      %p182 = scmp.ne.s32.totalorder %s168, %s169
      %p183 = scmp.eq.s32.totalorder %s24, 1
      %p184 = por %p182, %p183
      %p186 = scmp.ne.s32.totalorder %s169, %s185
      %p187 = scmp.eq.s32.totalorder %s24, 0
      %p188 = por %p186, %p187
      %p189 = scmp.le.s32.totalorder 1, %s18
      %p190 = scmp.lt.s32.totalorder %s18, 3
      %p191 = pnand %p189, %p190
      %p192 = pneg %p191
      // Predicated region
      $region9: #{positionwise_feedforward.1} parent=5 // pred_check
        _
      $region10: #{positionwise_feedforward.1} parent=5 // pred_check_branch
        %194 = sbr.rel (%p191) target = $region12
      $region11: #{positionwise_feedforward.1} parent=5 // pred_region
        %s195 = ssub.s32 %s18, 1
        // Predicated region
        $region13: #{positionwise_feedforward.1} parent=11 // pred_check
          %p196 = pneg %p82
        $region14: #{positionwise_feedforward.1} parent=11 // pred_check_branch
          %198 = sbr.rel (%p196) target = $region16
        $region15: #{positionwise_feedforward.1} parent=11 // pred_region
          %s199 = smul.u32 2, %s28
          %s201 = ssub.s32 4096, 4096
          %202 = vsyncadd [#allocation7], %s201
          %s203 = smul.addr %s199, 128
          %s204 = scalar_lea.hbm %s1, %s203
          %s205 = sshll.u32 [#allocation6], 4
          %s206 = int_to_ptr.vmem [resolvable:$true] %s205
          %211 = dma.hbm_to_vmem [thread:$0]  %s204, 4096, %s206, [#allocation7], 256, 256, 16
        $region16: #{positionwise_feedforward.1} parent=11 // pred_fallthru
          _
        // Predicated region
        $region17: #{positionwise_feedforward.1} parent=11 // pred_check
          %p212 = pneg %p108
        $region18: #{positionwise_feedforward.1} parent=11 // pred_check_branch
          %214 = sbr.rel (%p212) target = $region20
        $region19: #{positionwise_feedforward.1} parent=11 // pred_region
          %s215 = smul.u32 2, %s28
          %p216 = scmp.lt.s32.totalorder %s215, 1
          %s217 = scalar_select %p216, %s215, 1
          %s218 = scalar_lea.vmem %s2, %s217
          %s219 = smul.u32 2, %s28
        $region20: #{positionwise_feedforward.1} parent=11 // pred_fallthru
          _
        // Predicated region
        $region21: #{positionwise_feedforward.1} parent=11 // pred_check
          %p220 = pneg %p134
        $region22: #{positionwise_feedforward.1} parent=11 // pred_check_branch
          %222 = sbr.rel (%p220) target = $region24
        $region23: #{positionwise_feedforward.1} parent=11 // pred_region
          %s223 = smul.u32 32, %s28
          %s225 = ssub.s32 4096, 4096
          %226 = vsyncadd [#allocation7], %s225
          %s227 = smul.addr %s223, 128
          %s228 = scalar_lea.hbm %s3, %s227
          %s229 = sshll.u32 [#allocation8], 4
          %s230 = int_to_ptr.vmem [resolvable:$true] %s229
          %235 = dma.hbm_to_vmem [thread:$0]  %s228, 4096, %s230, [#allocation7], 128, 128, 8
        $region24: #{positionwise_feedforward.1} parent=11 // pred_fallthru
          _
        // Predicated region
        $region25: #{positionwise_feedforward.1} parent=11 // pred_check
          %p236 = pneg %p155
        $region26: #{positionwise_feedforward.1} parent=11 // pred_check_branch
          %238 = sbr.rel (%p236) target = $region28
        $region27: #{positionwise_feedforward.1} parent=11 // pred_region
          _
        $region28: #{positionwise_feedforward.1} parent=11 // pred_fallthru
          _
      $region12: #{positionwise_feedforward.1} parent=5 // pred_fallthru
        _
      %p239 = scmp.lt.s32.totalorder %s18, 2
      // Predicated region
      $region29: #{positionwise_feedforward.1} parent=5 // pred_check
        %p240 = pneg %p239
      $region30: #{positionwise_feedforward.1} parent=5 // pred_check_branch
        %242 = sbr.rel (%p240) target = $region32
      $region31: #{positionwise_feedforward.1} parent=5 // pred_region
        // Predicated region
        $region33: #{positionwise_feedforward.1} parent=31 // pred_check
          %p243 = pneg %p50
        $region34: #{positionwise_feedforward.1} parent=31 // pred_check_branch
          %245 = sbr.rel (%p243) target = $region36
        $region35: #{positionwise_feedforward.1} parent=31 // pred_region
          %s246 = sand.u32 %s40, 1
          %s247 = scalar_lea.sflag [#allocation4], %s246
          %s248 = sand.u32 %s40, 1
          %s249 = smul.addr %s248, 16
          %s250 = scalar_lea.vmem [#allocation3], %s249
          %s251 = smul.u32 2, %s25
          %s253 = ssub.s32 256, 256
          %254 = vsyncadd %s247, %s253
          %s255 = smul.addr %s251, 128
          %s256 = scalar_lea.hbm %s0, %s255
          %s257 = sshll.u32 %s250, 4
          %s258 = int_to_ptr.vmem [resolvable:$true] %s257
          %263 = dma.hbm_to_vmem [thread:$0]  %s256, 256, %s258, %s247, 128, 128, 8
        $region36: #{positionwise_feedforward.1} parent=31 // pred_fallthru
          _
      $region32: #{positionwise_feedforward.1} parent=5 // pred_fallthru
        _
      %p264 = scmp.le.s32.totalorder 1, %s18
      %p265 = scmp.lt.s32.totalorder %s18, 3
      %p266 = pnand %p264, %p265
      %p267 = pneg %p266
      // Predicated region
      $region37: #{positionwise_feedforward.1} parent=5 // pred_check
        _
      $region38: #{positionwise_feedforward.1} parent=5 // pred_check_branch
        %269 = sbr.rel (%p266) target = $region40
      $region39: #{positionwise_feedforward.1} parent=5 // pred_region
        %s270 = ssub.s32 %s18, 1
        %s271 = sand.u32 %s43, 1
        %s272 = scalar_lea.sflag [#allocation4], %s271
        %s273 = sand.u32 %s43, 1
        %s274 = smul.addr %s273, 16
        %s275 = scalar_lea.vmem [#allocation3], %s274
        // Predicated region
        $region41: #{positionwise_feedforward.1} parent=39 // pred_check
          %p276 = pneg %p56
        $region42: #{positionwise_feedforward.1} parent=39 // pred_check_branch
          %278 = sbr.rel (%p276) target = $region44
        $region43: #{positionwise_feedforward.1} parent=39 // pred_region
          %279 = dma.done %s272, 256
        $region44: #{positionwise_feedforward.1} parent=39 // pred_fallthru
          _
        // Predicated region
        $region45: #{positionwise_feedforward.1} parent=39 // pred_check
          %p280 = pneg %p82
        $region46: #{positionwise_feedforward.1} parent=39 // pred_check_branch
          %282 = sbr.rel (%p280) target = $region48
        $region47: #{positionwise_feedforward.1} parent=39 // pred_region
          %283 = dma.done [#allocation7], 4096
        $region48: #{positionwise_feedforward.1} parent=39 // pred_fallthru
          _
        // Predicated region
        $region49: #{positionwise_feedforward.1} parent=39 // pred_check
          %p284 = pneg %p134
        $region50: #{positionwise_feedforward.1} parent=39 // pred_check_branch
          %286 = sbr.rel (%p284) target = $region52
        $region51: #{positionwise_feedforward.1} parent=39 // pred_region
          %287 = dma.done [#allocation7], 4096
        $region52: #{positionwise_feedforward.1} parent=39 // pred_fallthru
          _
        %s288 = sand.u32 %s43, 1
        %s289 = scalar_lea.sflag [#allocation4], %s288
        %s290 = sand.u32 %s43, 1
        %s291 = smul.addr %s290, 16
        %s292 = scalar_lea.vmem [#allocation3], %s291
        %p293 = pneg %p56
        %p294 = pneg %p53
        %p295 = pneg %p82
        %p296 = pneg %p79
        %s297 = smul.u32 2, %s28
        %p298 = scmp.lt.s32.totalorder %s297, 1
        %s299 = scalar_select %p298, %s297, 1
        %s300 = scalar_lea.vmem %s2, %s299
        %p301 = pneg %p108
        %p302 = pneg %p105
        %p303 = pneg %p134
        %p304 = pneg %p131
        %p305 = pneg %p155
        %p306 = pneg %p152
        %p307 = pneg %p181
        %p308 = pneg %p178
        %s309 = sand.u32 %s168, 1
        %s310 = scalar_lea.sflag [#allocation5], %s309
        %s311 = sand.u32 %s168, 1
        %s312 = smul.addr %s311, 16
        %s313 = scalar_lea.vmem [#allocation9], %s312
        %s314 = smul.u32 2, %s27
        %s315 = smul.u32 2, %s28
        %s316 = smul.u32 2, %s28
        %p317 = scmp.lt.s32.totalorder %s316, 1
        %s318 = scalar_select %p317, %s316, 1
        %s319 = scalar_lea.vmem %s2, %s318
        %s320 = smul.u32 2, %s28
        %s321 = smul.u32 32, %s28
        %s322 = smul.u32 2, %s27
        %p323 = scmp.eq.s32.totalorder %s28, 0
        // Predicated region
        $region53: #{positionwise_feedforward.1} parent=39 // pred_check
          %p324 = pneg %p323
        $region54: #{positionwise_feedforward.1} parent=39 // pred_check_branch
          %326 = sbr.rel (%p324) target = $region56
        $region55: #{positionwise_feedforward.1} parent=39 // pred_region
          %327 = vst [vmem:[#allocation2] sm:$0xff] 0.0
          %328 = vst [vmem:[#allocation2 + $0x8] sm:$0xff] 0.0
        $region56: #{positionwise_feedforward.1} parent=39 // pred_fallthru
          _
        %v329 = vld [vmem:[%s275] sm:$0xff]
        %v330 = vld [vmem:[%s275 + $0x8] sm:$0xff]
        %v331 = vld [vmem:[#allocation6] sm:$0xff]
        %v332 = vld [vmem:[#allocation6 + $0x8] sm:$0xff]
        %v333 = vld [vmem:[#allocation6 + $0x10] sm:$0xff]
        %v334 = vld [vmem:[#allocation6 + $0x18] sm:$0xff]
        %v335 = vld [vmem:[#allocation6 + $0x20] sm:$0xff]
        %v336 = vld [vmem:[#allocation6 + $0x28] sm:$0xff]
        %v337 = vld [vmem:[#allocation6 + $0x30] sm:$0xff]
        %v338 = vld [vmem:[#allocation6 + $0x38] sm:$0xff]
        %v339 = vld [vmem:[#allocation6 + $0x40] sm:$0xff]
        %v340 = vld [vmem:[#allocation6 + $0x48] sm:$0xff]
        %v341 = vld [vmem:[#allocation6 + $0x50] sm:$0xff]
        %v342 = vld [vmem:[#allocation6 + $0x58] sm:$0xff]
        %v343 = vld [vmem:[#allocation6 + $0x60] sm:$0xff]
        %v344 = vld [vmem:[#allocation6 + $0x68] sm:$0xff]
        %v345 = vld [vmem:[#allocation6 + $0x70] sm:$0xff]
        %v346 = vld [vmem:[#allocation6 + $0x78] sm:$0xff]
        %v347 = vld [vmem:[#allocation6 + $0x80] sm:$0xff]
        %v348 = vld [vmem:[#allocation6 + $0x88] sm:$0xff]
        %v349 = vld [vmem:[#allocation6 + $0x90] sm:$0xff]
        %v350 = vld [vmem:[#allocation6 + $0x98] sm:$0xff]
        %v351 = vld [vmem:[#allocation6 + $0xa0] sm:$0xff]
        %v352 = vld [vmem:[#allocation6 + $0xa8] sm:$0xff]
        %v353 = vld [vmem:[#allocation6 + $0xb0] sm:$0xff]
        %v354 = vld [vmem:[#allocation6 + $0xb8] sm:$0xff]
        %v355 = vld [vmem:[#allocation6 + $0xc0] sm:$0xff]
        %v356 = vld [vmem:[#allocation6 + $0xc8] sm:$0xff]
        %v357 = vld [vmem:[#allocation6 + $0xd0] sm:$0xff]
        %v358 = vld [vmem:[#allocation6 + $0xd8] sm:$0xff]
        %v359 = vld [vmem:[#allocation6 + $0xe0] sm:$0xff]
        %v360 = vld [vmem:[#allocation6 + $0xe8] sm:$0xff]
        %v361 = vld [vmem:[#allocation6 + $0xf0] sm:$0xff]
        %v362 = vld [vmem:[#allocation6 + $0xf8] sm:$0xff]
        %v363 = vld [vmem:[%s319] sm:$0x3]
        %v365 = vlaneseq
        %v366 = vshrl.u32 %v365, 7
        %v367 = vsub.s32 0, %v366
        %v368 = vrot.slane %v363, %v367
        %v369 = vlaneseq
        %v370 = vshrl.u32 %v369, 7
        %v371 = vsub.s32 1, %v370
        %v372 = vrot.slane %v363, %v371
        %375 = vmatprep.subr.mxu0 %v332
        %376 = vmatpush1.msra.mxu0 %v331
        %377 = vmatprep.subr.mxu0 %v334
        %378 = vmatpush1.msra.mxu0 %v333
        %379 = vmatprep.subr.mxu0 %v336
        %380 = vmatpush1.msra.mxu0 %v335
        %381 = vmatprep.subr.mxu0 %v338
        %382 = vmatpush1.msra.mxu0 %v337
        %383 = vmatprep.subr.mxu0 %v340
        %384 = vmatpush1.msra.mxu0 %v339
        %385 = vmatprep.subr.mxu0 %v342
        %386 = vmatpush1.msra.mxu0 %v341
        %387 = vmatprep.subr.mxu0 %v344
        %388 = vmatpush1.msra.mxu0 %v343
        %389 = vmatprep.subr.mxu0 %v346
        %390 = vmatpush1.msra.mxu0 %v345
        %391 = vmatprep.subr.mxu0 %v348
        %392 = vmatpush1.msra.mxu0 %v347
        %393 = vmatprep.subr.mxu0 %v350
        %394 = vmatpush1.msra.mxu0 %v349
        %395 = vmatprep.subr.mxu0 %v352
        %396 = vmatpush1.msra.mxu0 %v351
        %397 = vmatprep.subr.mxu0 %v354
        %398 = vmatpush1.msra.mxu0 %v353
        %399 = vmatprep.subr.mxu0 %v356
        %400 = vmatpush1.msra.mxu0 %v355
        %401 = vmatprep.subr.mxu0 %v358
        %402 = vmatpush1.msra.mxu0 %v357
        %403 = vmatprep.subr.mxu0 %v360
        %404 = vmatpush1.msra.mxu0 %v359
        %405 = vmatprep.subr.mxu0 %v362
        %406 = vmatpush1.msra.mxu0 %v361
        %407 = vmatprep.subr.mxu0 0.0
        %408 = vmatpush1.msra.mxu0 0.0
        %409 = vmatprep.subr.mxu0 0.0
        %410 = vmatpush1.msra.mxu0 0.0
        %411 = vmatprep.subr.mxu0 0.0
        %412 = vmatpush1.msra.mxu0 0.0
        %413 = vmatprep.subr.mxu0 0.0
        %414 = vmatpush1.msra.mxu0 0.0
        %415 = vmatprep.subr.mxu0 0.0
        %416 = vmatpush1.msra.mxu0 0.0
        %417 = vmatprep.subr.mxu0 0.0
        %418 = vmatpush1.msra.mxu0 0.0
        %419 = vmatprep.subr.mxu0 0.0
        %420 = vmatpush1.msra.mxu0 0.0
        %421 = vmatprep.subr.mxu0 0.0
        %422 = vmatpush1.msra.mxu0 0.0
        %423 = vmatprep.subr.mxu0 0.0
        %424 = vmatpush1.msra.mxu0 0.0
        %425 = vmatprep.subr.mxu0 0.0
        %426 = vmatpush1.msra.mxu0 0.0
        %427 = vmatprep.subr.mxu0 0.0
        %428 = vmatpush1.msra.mxu0 0.0
        %429 = vmatprep.subr.mxu0 0.0
        %430 = vmatpush1.msra.mxu0 0.0
        %431 = vmatprep.subr.mxu0 0.0
        %432 = vmatpush1.msra.mxu0 0.0
        %433 = vmatprep.subr.mxu0 0.0
        %434 = vmatpush1.msra.mxu0 0.0
        %435 = vmatprep.subr.mxu0 0.0
        %436 = vmatpush1.msra.mxu0 0.0
        %437 = vmatprep.subr.mxu0 0.0
        %438 = vmatpush1.msra.mxu0 0.0
        %439 = vmatprep.mubr.f32.mxu0 0.0
        %440 = vmatmul.mubr.f32.gmra.mrb[0].mxu0 %v329
        %v441 = vpop.f32.mrb[0].mxu0
        %v442 = vadd.f32 %v368, %v441
        %v443 = vpop.f32.mrb[0].mxu0
        %v444 = vadd.f32 %v372, %v443
        %445 = vmatprep.mubr.f32.mxu0 0.0
        %446 = vmatmul.mubr.f32.gmra.mrb[0].mxu0 %v330
        %v447 = vpop.f32.mrb[0].mxu0
        %v448 = vadd.f32 %v368, %v447
        %v449 = vpop.f32.mrb[0].mxu0
        %v450 = vadd.f32 %v372, %v449
        %451 = vdwg.mxu0
        %v452 = vmax.f32 %v442, 0.0
        %v453 = vmax.f32 %v444, 0.0
        %v454 = vmax.f32 %v448, 0.0
        %v455 = vmax.f32 %v450, 0.0
        %v456 = vld [vmem:[#allocation2] sm:$0xff]
        %v457 = vld [vmem:[#allocation2 + $0x8] sm:$0xff]
        %v458 = vld [vmem:[#allocation8] sm:$0xff]
        %v459 = vld [vmem:[#allocation8 + $0x8] sm:$0xff]
        %v460 = vld [vmem:[#allocation8 + $0x10] sm:$0xff]
        %v461 = vld [vmem:[#allocation8 + $0x18] sm:$0xff]
        %v462 = vld [vmem:[#allocation8 + $0x20] sm:$0xff]
        %v463 = vld [vmem:[#allocation8 + $0x28] sm:$0xff]
        %v464 = vld [vmem:[#allocation8 + $0x30] sm:$0xff]
        %v465 = vld [vmem:[#allocation8 + $0x38] sm:$0xff]
        %v466 = vld [vmem:[#allocation8 + $0x40] sm:$0xff]
        %v467 = vld [vmem:[#allocation8 + $0x48] sm:$0xff]
        %v468 = vld [vmem:[#allocation8 + $0x50] sm:$0xff]
        %v469 = vld [vmem:[#allocation8 + $0x58] sm:$0xff]
        %v470 = vld [vmem:[#allocation8 + $0x60] sm:$0xff]
        %v471 = vld [vmem:[#allocation8 + $0x68] sm:$0xff]
        %v472 = vld [vmem:[#allocation8 + $0x70] sm:$0xff]
        %v473 = vld [vmem:[#allocation8 + $0x78] sm:$0xff]
        %v474 = vld [vmem:[#allocation8 + $0x80] sm:$0xff]
        %v475 = vld [vmem:[#allocation8 + $0x88] sm:$0xff]
        %v476 = vld [vmem:[#allocation8 + $0x90] sm:$0xff]
        %v477 = vld [vmem:[#allocation8 + $0x98] sm:$0xff]
        %v478 = vld [vmem:[#allocation8 + $0xa0] sm:$0xff]
        %v479 = vld [vmem:[#allocation8 + $0xa8] sm:$0xff]
        %v480 = vld [vmem:[#allocation8 + $0xb0] sm:$0xff]
        %v481 = vld [vmem:[#allocation8 + $0xb8] sm:$0xff]
        %v482 = vld [vmem:[#allocation8 + $0xc0] sm:$0xff]
        %v483 = vld [vmem:[#allocation8 + $0xc8] sm:$0xff]
        %v484 = vld [vmem:[#allocation8 + $0xd0] sm:$0xff]
        %v485 = vld [vmem:[#allocation8 + $0xd8] sm:$0xff]
        %v486 = vld [vmem:[#allocation8 + $0xe0] sm:$0xff]
        %v487 = vld [vmem:[#allocation8 + $0xe8] sm:$0xff]
        %v488 = vld [vmem:[#allocation8 + $0xf0] sm:$0xff]
        %v489 = vld [vmem:[#allocation8 + $0xf8] sm:$0xff]
        %490 = vmatprep.subr.mxu0 0.0
        %491 = vmatpush1.msra.mxu0 %v458
        %492 = vmatprep.subr.mxu0 0.0
        %493 = vmatpush1.msra.mxu0 %v459
        %494 = vmatprep.subr.mxu0 0.0
        %495 = vmatpush1.msra.mxu0 %v460
        %496 = vmatprep.subr.mxu0 0.0
        %497 = vmatpush1.msra.mxu0 %v461
        %498 = vmatprep.subr.mxu0 0.0
        %499 = vmatpush1.msra.mxu0 %v462
        %500 = vmatprep.subr.mxu0 0.0
        %501 = vmatpush1.msra.mxu0 %v463
        %502 = vmatprep.subr.mxu0 0.0
        %503 = vmatpush1.msra.mxu0 %v464
        %504 = vmatprep.subr.mxu0 0.0
        %505 = vmatpush1.msra.mxu0 %v465
        %506 = vmatprep.subr.mxu0 0.0
        %507 = vmatpush1.msra.mxu0 %v466
        %508 = vmatprep.subr.mxu0 0.0
        %509 = vmatpush1.msra.mxu0 %v467
        %510 = vmatprep.subr.mxu0 0.0
        %511 = vmatpush1.msra.mxu0 %v468
        %512 = vmatprep.subr.mxu0 0.0
        %513 = vmatpush1.msra.mxu0 %v469
        %514 = vmatprep.subr.mxu0 0.0
        %515 = vmatpush1.msra.mxu0 %v470
        %516 = vmatprep.subr.mxu0 0.0
        %517 = vmatpush1.msra.mxu0 %v471
        %518 = vmatprep.subr.mxu0 0.0
        %519 = vmatpush1.msra.mxu0 %v472
        %520 = vmatprep.subr.mxu0 0.0
        %521 = vmatpush1.msra.mxu0 %v473
        %522 = vmatprep.subr.mxu0 0.0
        %523 = vmatpush1.msra.mxu0 %v474
        %524 = vmatprep.subr.mxu0 0.0
        %525 = vmatpush1.msra.mxu0 %v475
        %526 = vmatprep.subr.mxu0 0.0
        %527 = vmatpush1.msra.mxu0 %v476
        %528 = vmatprep.subr.mxu0 0.0
        %529 = vmatpush1.msra.mxu0 %v477
        %530 = vmatprep.subr.mxu0 0.0
        %531 = vmatpush1.msra.mxu0 %v478
        %532 = vmatprep.subr.mxu0 0.0
        %533 = vmatpush1.msra.mxu0 %v479
        %534 = vmatprep.subr.mxu0 0.0
        %535 = vmatpush1.msra.mxu0 %v480
        %536 = vmatprep.subr.mxu0 0.0
        %537 = vmatpush1.msra.mxu0 %v481
        %538 = vmatprep.subr.mxu0 0.0
        %539 = vmatpush1.msra.mxu0 %v482
        %540 = vmatprep.subr.mxu0 0.0
        %541 = vmatpush1.msra.mxu0 %v483
        %542 = vmatprep.subr.mxu0 0.0
        %543 = vmatpush1.msra.mxu0 %v484
        %544 = vmatprep.subr.mxu0 0.0
        %545 = vmatpush1.msra.mxu0 %v485
        %546 = vmatprep.subr.mxu0 0.0
        %547 = vmatpush1.msra.mxu0 %v486
        %548 = vmatprep.subr.mxu0 0.0
        %549 = vmatpush1.msra.mxu0 %v487
        %550 = vmatprep.subr.mxu0 0.0
        %551 = vmatpush1.msra.mxu0 %v488
        %552 = vmatprep.subr.mxu0 0.0
        %553 = vmatpush1.msra.mxu0 %v489
        %554 = vmatprep.mubr.f32.mxu0 %v453
        %555 = vmatmul.mubr.f32.gmra.mrb[0].mxu0 %v452
        %v556 = vpop.f32.mrb[0].mxu0
        %v557 = vadd.f32 0.0, %v556
        %v558 = vpop.f32.mrb[0].mxu0
        %559 = vmatprep.mubr.f32.mxu0 %v455
        %560 = vmatmul.mubr.f32.gmra.mrb[0].mxu0 %v454
        %v561 = vpop.f32.mrb[0].mxu0
        %v562 = vadd.f32 0.0, %v561
        %v563 = vpop.f32.mrb[0].mxu0
        %564 = vdwg.mxu0
        %v565 = vadd.f32 %v456, %v557
        %v566 = vadd.f32 %v457, %v562
        %567 = vst [vmem:[#allocation2] sm:$0xff] %v565
        %568 = vst [vmem:[#allocation2 + $0x8] sm:$0xff] %v566
        // Predicated region
        $region57: #{positionwise_feedforward.1} parent=39 // pred_check
          %p569 = pneg %p323
        $region58: #{positionwise_feedforward.1} parent=39 // pred_check_branch
          %571 = sbr.rel (%p569) target = $region60
        $region59: #{positionwise_feedforward.1} parent=39 // pred_region
          %v572 = vld [vmem:[#allocation2] sm:$0xff]
          %v573 = vld [vmem:[#allocation2 + $0x8] sm:$0xff]
          %v574 = vld [vmem:[%s4] sm:$0x1]
          %v576 = vlaneseq
          %v577 = vshrl.u32 %v576, 7
          %v578 = vsub.s32 0, %v577
          %v579 = vrot.slane %v574, %v578
          %v581 = vadd.f32 %v572, %v579
          %v582 = vadd.f32 %v573, %v579
          %583 = vst [vmem:[%s313] sm:$0xff] %v581
          %584 = vst [vmem:[%s313 + $0x8] sm:$0xff] %v582
        $region60: #{positionwise_feedforward.1} parent=39 // pred_fallthru
          _
        %s585 = sand.u32 %s168, 1
        %s586 = scalar_lea.sflag [#allocation5], %s585
        %s587 = sand.u32 %s168, 1
        %s588 = smul.addr %s587, 16
        %s589 = scalar_lea.vmem [#allocation9], %s588
        // Predicated region
        $region61: #{positionwise_feedforward.1} parent=39 // pred_check
          %p590 = pneg %p178
        $region62: #{positionwise_feedforward.1} parent=39 // pred_check_branch
          %592 = sbr.rel (%p590) target = $region64
        $region63: #{positionwise_feedforward.1} parent=39 // pred_region
          %s593 = smul.u32 2, %s27
          %s595 = ssub.s32 256, 256
          %596 = vsyncadd %s586, %s595
          %s597 = smul.addr %s593, 128
          %s598 = scalar_lea.hbm %s5, %s597
          %s599 = sshll.u32 %s589, 4
          %s600 = int_to_ptr.vmem [resolvable:$true] %s599
          %605 = dma.vmem_to_hbm [thread:$0]  %s600, 256, %s598, %s586, 128, 128, 8
        $region64: #{positionwise_feedforward.1} parent=39 // pred_fallthru
          _
      $region40: #{positionwise_feedforward.1} parent=5 // pred_fallthru
        _
      %p606 = scmp.le.s32.totalorder 2, %s18
      // Predicated region
      $region65: #{positionwise_feedforward.1} parent=5 // pred_check
        %p607 = pneg %p606
      $region66: #{positionwise_feedforward.1} parent=5 // pred_check_branch
        %609 = sbr.rel (%p607) target = $region68
      $region67: #{positionwise_feedforward.1} parent=5 // pred_region
        %s610 = ssub.s32 %s18, 2
        // Predicated region
        $region69: #{positionwise_feedforward.1} parent=67 // pred_check
          %p611 = pneg %p184
        $region70: #{positionwise_feedforward.1} parent=67 // pred_check_branch
          %613 = sbr.rel (%p611) target = $region72
        $region71: #{positionwise_feedforward.1} parent=67 // pred_region
          %s614 = sand.u32 %s169, 1
          %s615 = scalar_lea.sflag [#allocation5], %s614
          %s616 = sand.u32 %s169, 1
          %s617 = smul.addr %s616, 16
          %s618 = scalar_lea.vmem [#allocation9], %s617
          %619 = dma.done %s615, 256
        $region72: #{positionwise_feedforward.1} parent=67 // pred_fallthru
          _
      $region68: #{positionwise_feedforward.1} parent=5 // pred_fallthru
        _
    $region6: #{positionwise_feedforward.1} parent=1 // loop_footer
      %s22 = sadd.s32 1, %s18
    $region7: #{positionwise_feedforward.1} parent=1 // loop_footer_branch
      %17 = sbr.rel target = $region3
    $region8: #{positionwise_feedforward.1} parent=1 // loop_exit
      _
    %620 = vsyncpa [#allocation4], 1
    %s621 = scalar_lea.sflag [#allocation4], 1
    %622 = vsyncpa %s621, 1
    %623 = vsyncpa [#allocation7], 1
    %624 = vsyncpa [#allocation5], 1
    %s625 = scalar_lea.sflag [#allocation5], 1
    %626 = vsyncpa %s625, 1

</llo_original>
